<compile_context>
chip_gen: v6e
topology: v6e:2x2x1
jax: 0.10.0
libtpu: 0.0.40
codegen_flags: <defaults>
</compile_context>

<pallas_src>
import functools

import jax
import jax.numpy as jnp
from jax.experimental import pallas as pl
from jax.experimental.pallas import tpu as pltpu


def _bow_elmo_kernel(lengths_ref, emb_ref, out_ref, *, aggregation: str):
    """One grid step handles TB lines of the batch.

    lengths_ref : VMEM i32[TB, 1]          per-line true token counts
    emb_ref     : VMEM f32[TB, L, T, D]    (sum / average)
                  VMEM f32[TB, 1, T, D]    (last / first: layer picked by BlockSpec)
    out_ref     : VMEM f32[TB, T, D]       aggregated + zero-padded embeddings
    """
    emb = emb_ref[...]

    if aggregation == "sum":
        agg = jnp.sum(emb, axis=1)
    elif aggregation == "average":
        agg = jnp.mean(emb, axis=1)
    else:
        # 'last' / 'first': the single required layer was already selected by
        # the input BlockSpec's index_map, so the layer axis has size 1 here.
        agg = emb[:, 0]

    TB, T, _D = out_ref.shape
    # Vectorized padding mask: (TB, T, 1) token ids vs (TB, 1, 1) lengths,
    # broadcast over the lane (D) axis by jnp.where.
    tok_ids = jax.lax.broadcasted_iota(jnp.int32, (TB, T, 1), 1)
    mask = tok_ids < lengths_ref[...][:, None, :]
    out_ref[...] = jnp.where(mask, agg, 0.0)


def bow_elmo_embed(elmo_embeddings: jax.Array,
                   token_lengths: jax.Array,
                   layer_aggregation: str = "sum",
                   tb: int | None = None) -> jax.Array:
    """Pallas implementation of BowElmoEmbedder.forward.

    elmo_embeddings : f32[B, L, T, D]  per-line, per-layer ELMO representations
    token_lengths   : i32[B]           number of real tokens per line
    returns         : f32[B, T, D]
    """
    assert layer_aggregation in ("sum", "average", "last", "first")
    B, L, T, D = elmo_embeddings.shape

    # Auto-pick batch-tile size TB:
    #   double-buffered working set  ~ 2 * TB * (L + 1) * T * D * 4 bytes
    #   keep it under ~12 MiB so the default scoped-VMEM limit is safe on all
    #   of v5e (16 MiB), v6e (32 MiB) and v7x (32 MiB scoped / 64 MiB physical).
    if tb is None:
        bytes_per_line = (L + 1) * T * D * 4
        cap = max(8, ((12 << 20) // (2 * bytes_per_line)) // 8 * 8)
        tb = B if B <= cap else cap
    grid = (pl.cdiv(B, tb),)

    lengths2d = token_lengths.reshape(B, 1).astype(jnp.int32)

    if layer_aggregation in ("sum", "average"):
        emb_spec = pl.BlockSpec((tb, L, T, D), lambda i: (i, 0, 0, 0))
        flops = B * L * T * D
        bytes_accessed = (B * L * T * D + B * T * D) * 4 + B * 4
    else:
        # DMA only the one needed layer: ~3x less HBM traffic for L=3.
        layer = L - 1 if layer_aggregation == "last" else 0
        emb_spec = pl.BlockSpec((tb, 1, T, D), lambda i, _l=layer: (i, _l, 0, 0))
        flops = B * T * D
        bytes_accessed = (B * T * D + B * T * D) * 4 + B * 4

    kernel = functools.partial(_bow_elmo_kernel, aggregation=layer_aggregation)

    return pl.pallas_call(
        kernel,
        out_shape=jax.ShapeDtypeStruct((B, T, D), jnp.float32),
        grid=grid,
        in_specs=[
            pl.BlockSpec((tb, 1), lambda i: (i, 0)),   # token lengths (VMEM)
            emb_spec,                                  # ELMO embeddings
        ],
        out_specs=pl.BlockSpec((tb, T, D), lambda i: (i, 0, 0)),
        compiler_params=pltpu.CompilerParams(
            dimension_semantics=("parallel",)),
        cost_estimate=pl.CostEstimate(
            flops=flops, transcendentals=0, bytes_accessed=bytes_accessed),
    )(lengths2d, elmo_embeddings)


def _reference(elmo_embeddings, token_lengths, layer_aggregation):
    """Plain-JAX reference mirroring the PyTorch loop semantics."""
    if layer_aggregation == "sum":
        agg = jnp.sum(elmo_embeddings, axis=1)
    elif layer_aggregation == "average":
        agg = jnp.mean(elmo_embeddings, axis=1)
    elif layer_aggregation == "last":
        agg = elmo_embeddings[:, -1]
    else:  # first
        agg = elmo_embeddings[:, 0]
    B, T, D = agg.shape
    mask = (jnp.arange(T)[None, :, None] < token_lengths[:, None, None])
    return jnp.where(mask, agg, 0.0)


if __name__ == "__main__":
    # Small synthetic shapes consistent with the module's forward:
    # batch=2 lines, ELMO's 3 layers, max_num_words=8, emb_dim=1024.
    key = jax.random.PRNGKey(0)
    k_small, k_big = jax.random.split(key)

    # TODO(synk): the actual ElmoEmbedder (pretrained biLM) has no in-script
    # equivalent; deterministic synthetic embeddings stand in for its output.
    B, L, T, D = 2, 3, 8, 1024
    emb_small = jax.random.normal(k_small, (B, L, T, D), dtype=jnp.float32)
    len_small = jnp.array([8, 5], dtype=jnp.int32)  # second line is padded

    for agg in ("sum", "average", "last", "first"):
        out = bow_elmo_embed(emb_small, len_small, layer_aggregation=agg)
        out = jax.block_until_ready(out)
        ref = _reference(emb_small, len_small, agg)
        assert out.shape == (B, T, D)
        assert jnp.allclose(out, ref, atol=1e-5, rtol=1e-5), f"mismatch for {agg}"

    # Multi-tile exercise of the batch-tiled grid (TB=8, grid of 2 steps).
    B2 = 16
    emb_big = jax.random.normal(k_big, (B2, L, T, D), dtype=jnp.float32)
    len_big = (jnp.arange(B2, dtype=jnp.int32) % T) + 1
    for agg in ("sum", "last"):
        out = bow_elmo_embed(emb_big, len_big, layer_aggregation=agg, tb=8)
        out = jax.block_until_ready(out)
        ref = _reference(emb_big, len_big, agg)
        assert jnp.allclose(out, ref, atol=1e-5, rtol=1e-5), f"mismatch for {agg} (tiled)"

    print("KERNEL_OK")
</pallas_src>

<mosaic_0001>
module attributes {stable_mosaic.version = 11 : i64} {
  func.func @_bow_elmo_kernel(%arg0: i32, %arg1: memref<2x1xi32, #tpu.memory_space<vmem>>, %arg2: memref<2x3x8x1024xf32, #tpu.memory_space<vmem>>, %arg3: memref<2x8x1024xf32, #tpu.memory_space<vmem>>) attributes {dimension_semantics = [#tpu.dimension_semantics<parallel>], iteration_bounds = array<i64: 1>, scalar_prefetch = 0 : i64, scratch_operands = 0 : i64, tpu.core_type = #tpu.core_type<tc>, window_params = [{transform_indices = @transform_0, window_bounds = array<i64: 2, 1>}, {transform_indices = @transform_1, window_bounds = array<i64: 2, 3, 8, 1024>}, {transform_indices = @transform_2, window_bounds = array<i64: 2, 8, 1024>}]} {
    %c0 = arith.constant 0 : index
    %c0_0 = arith.constant 0 : index
    %c0_1 = arith.constant 0 : index
    %c0_2 = arith.constant 0 : index
    %0 = vector.load %arg2[%c0, %c0_0, %c0_1, %c0_2] : memref<2x3x8x1024xf32, #tpu.memory_space<vmem>>, vector<2x3x8x1024xf32>
    %cst = arith.constant dense<0.000000e+00> : vector<2x8x1024xf32>
    %1 = vector.multi_reduction <add>, %0, %cst [1] : vector<2x3x8x1024xf32> to vector<2x8x1024xf32>
    %2 = tpu.iota {dimensions = array<i32: 1>} : vector<2x8x1xi32>
    %c0_3 = arith.constant 0 : index
    %c0_4 = arith.constant 0 : index
    %3 = vector.load %arg1[%c0_3, %c0_4] : memref<2x1xi32, #tpu.memory_space<vmem>>, vector<2x1xi32>
    %4 = vector.shape_cast %3 : vector<2x1xi32> to vector<2x1x1xi32>
    %5 = vector.broadcast %4 : vector<2x1x1xi32> to vector<2x8x1xi32>
    %6 = arith.cmpi slt, %2, %5 : vector<2x8x1xi32>
    %cst_5 = arith.constant 0.000000e+00 : f32
    %7 = vector.shape_cast %6 : vector<2x8x1xi1> to vector<2x8x1xi1>
    %8 = vector.broadcast %7 : vector<2x8x1xi1> to vector<2x8x1024xi1>
    %9 = vector.broadcast %cst_5 : f32 to vector<2x8x1024xf32>
    %10 = arith.select %8, %1, %9 : vector<2x8x1024xi1>, vector<2x8x1024xf32>
    %c0_6 = arith.constant 0 : index
    %c0_7 = arith.constant 0 : index
    %c0_8 = arith.constant 0 : index
    %11 = vector.load %arg3[%c0_6, %c0_7, %c0_8] : memref<2x8x1024xf32, #tpu.memory_space<vmem>>, vector<2x8x1024xf32>
    tpu.vector_store %arg3[%c0_6, %c0_7, %c0_8], %10 {strides = array<i32>} : memref<2x8x1024xf32, #tpu.memory_space<vmem>>, vector<2x8x1024xf32>,
    return
  }
  func.func @transform_0(%arg0: i32) -> (i32, i32) {
    %c0_i32 = arith.constant 0 : i32
    %c0_i32_0 = arith.constant 0 : i32
    return %arg0, %c0_i32 : i32, i32
  }
  func.func @transform_1(%arg0: i32) -> (i32, i32, i32, i32) {
    %c0_i32 = arith.constant 0 : i32
    %c0_i32_0 = arith.constant 0 : i32
    %c0_i32_1 = arith.constant 0 : i32
    %c0_i32_2 = arith.constant 0 : i32
    return %arg0, %c0_i32, %c0_i32_0, %c0_i32_1 : i32, i32, i32, i32
  }
  func.func @transform_2(%arg0: i32) -> (i32, i32, i32) {
    %c0_i32 = arith.constant 0 : i32
    %c0_i32_0 = arith.constant 0 : i32
    %c0_i32_1 = arith.constant 0 : i32
    return %arg0, %c0_i32, %c0_i32_0 : i32, i32, i32
  }
}

</mosaic_0001>

<llo_original>
// kernel: tpu_custom_call.1
$region0: #{tpu_custom_call.1}
  #allocation0 [shape = 'u32[]', space=smem, size = 0x4, offset = 0x4, fixed_abs, tag = 'smem constant byte address 0x4 - core index']
  #allocation1 [shape = 'u32[144,128]{1,0:T(1,128)}', space=vmem, size = 0x12000, scoped, tag = 'internal scratch']
  %s0 = inlined_call_operand.vmem [shape: s32[2,1], index: 0, kind: input, shape index: {}]
  %s1 = inlined_call_operand.hbm [shape: f32[2,3,8,1024], index: 1, kind: input, shape index: {}]
  %s2 = inlined_call_operand.hbm [shape: f32[2,8,1024], index: 2, kind: output, shape index: {}]
  %s3 = sld [smem:[#allocation0]]
  $region22: #{tpu_custom_call.1} parent=0
    _
  %s5 = ssub.s32 1, %s3
  %s6 = scalar_select 0, %s5, %s3
  $region1: #{tpu_custom_call.1} parent=0
    #allocation2 [shape = 'u8[196608]{0}', space=vmem, size = 0x30000, scoped, tag = 'input window, operand 1, single buffered']
    #allocation3 [shape = 's32[1]{0}', space=sflag, size = 0x4, scoped, tag = 'scoped memory for tpu_custom_call.1']
    #allocation4 [shape = 's32[1]{0}', space=sflag, size = 0x4, scoped, tag = 'scoped memory for tpu_custom_call.1']
    #allocation5 [shape = 'u8[65536]{0}', space=vmem, size = 0x10000, scoped, tag = 'output window, operand 0, single buffered']
    %7 = vsyncpa [#allocation3], 0
    %8 = vsyncpa [#allocation4], 0
    // Predicated region
    $region2: #{tpu_custom_call.1} parent=1 // pred_check
      _
    $region3: #{tpu_custom_call.1} parent=1 // pred_check_branch
      %10 = sbr.rel (0) target = $region5
    $region4: #{tpu_custom_call.1} parent=1 // pred_region
      _
    $region5: #{tpu_custom_call.1} parent=1 // pred_fallthru
      _
    // Predicated region
    $region6: #{tpu_custom_call.1} parent=1 // pred_check
      _
    $region7: #{tpu_custom_call.1} parent=1 // pred_check_branch
      %12 = sbr.rel (0) target = $region9
    $region8: #{tpu_custom_call.1} parent=1 // pred_region
      %s14 = ssub.s32 6144, 6144
      %15 = vsyncadd [#allocation3], %s14
      %s16 = sshll.u32 [#allocation2], 4
      %s17 = int_to_ptr.vmem [resolvable:$true] %s16
      %22 = dma.hbm_to_vmem [thread:$0]  %s1, 6144, %s17, [#allocation3], 1024, 1024, 64
    $region9: #{tpu_custom_call.1} parent=1 // pred_fallthru
      _
    // Predicated region
    $region10: #{tpu_custom_call.1} parent=1 // pred_check
      _
    $region11: #{tpu_custom_call.1} parent=1 // pred_check_branch
      %24 = sbr.rel (0) target = $region13
    $region12: #{tpu_custom_call.1} parent=1 // pred_region
      %25 = dma.done [#allocation3], 6144
    $region13: #{tpu_custom_call.1} parent=1 // pred_fallthru
      _
    %v26 = vld [vmem:[#allocation2] sm:$0xff]
    %v27 = vld [vmem:[#allocation2 + $0x8] sm:$0xff]
    %v28 = vld [vmem:[#allocation2 + $0x10] sm:$0xff]
    %v29 = vld [vmem:[#allocation2 + $0x18] sm:$0xff]
    %v30 = vld [vmem:[#allocation2 + $0x20] sm:$0xff]
    %v31 = vld [vmem:[#allocation2 + $0x28] sm:$0xff]
    %v32 = vld [vmem:[#allocation2 + $0x30] sm:$0xff]
    %v33 = vld [vmem:[#allocation2 + $0x38] sm:$0xff]
    %v34 = vld [vmem:[#allocation2 + $0x40] sm:$0xff]
    %v35 = vld [vmem:[#allocation2 + $0x48] sm:$0xff]
    %v36 = vld [vmem:[#allocation2 + $0x50] sm:$0xff]
    %v37 = vld [vmem:[#allocation2 + $0x58] sm:$0xff]
    %v38 = vld [vmem:[#allocation2 + $0x60] sm:$0xff]
    %v39 = vld [vmem:[#allocation2 + $0x68] sm:$0xff]
    %v40 = vld [vmem:[#allocation2 + $0x70] sm:$0xff]
    %v41 = vld [vmem:[#allocation2 + $0x78] sm:$0xff]
    %v42 = vld [vmem:[#allocation2 + $0x80] sm:$0xff]
    %v43 = vld [vmem:[#allocation2 + $0x88] sm:$0xff]
    %v44 = vld [vmem:[#allocation2 + $0x90] sm:$0xff]
    %v45 = vld [vmem:[#allocation2 + $0x98] sm:$0xff]
    %v46 = vld [vmem:[#allocation2 + $0xa0] sm:$0xff]
    %v47 = vld [vmem:[#allocation2 + $0xa8] sm:$0xff]
    %v48 = vld [vmem:[#allocation2 + $0xb0] sm:$0xff]
    %v49 = vld [vmem:[#allocation2 + $0xb8] sm:$0xff]
    %v50 = vld [vmem:[#allocation2 + $0xc0] sm:$0xff]
    %v51 = vld [vmem:[#allocation2 + $0xc8] sm:$0xff]
    %v52 = vld [vmem:[#allocation2 + $0xd0] sm:$0xff]
    %v53 = vld [vmem:[#allocation2 + $0xd8] sm:$0xff]
    %v54 = vld [vmem:[#allocation2 + $0xe0] sm:$0xff]
    %v55 = vld [vmem:[#allocation2 + $0xe8] sm:$0xff]
    %v56 = vld [vmem:[#allocation2 + $0xf0] sm:$0xff]
    %v57 = vld [vmem:[#allocation2 + $0xf8] sm:$0xff]
    %v58 = vld [vmem:[#allocation2 + $0x100] sm:$0xff]
    %v59 = vld [vmem:[#allocation2 + $0x108] sm:$0xff]
    %v60 = vld [vmem:[#allocation2 + $0x110] sm:$0xff]
    %v61 = vld [vmem:[#allocation2 + $0x118] sm:$0xff]
    %v62 = vld [vmem:[#allocation2 + $0x120] sm:$0xff]
    %v63 = vld [vmem:[#allocation2 + $0x128] sm:$0xff]
    %v64 = vld [vmem:[#allocation2 + $0x130] sm:$0xff]
    %v65 = vld [vmem:[#allocation2 + $0x138] sm:$0xff]
    %v66 = vld [vmem:[#allocation2 + $0x140] sm:$0xff]
    %v67 = vld [vmem:[#allocation2 + $0x148] sm:$0xff]
    %v68 = vld [vmem:[#allocation2 + $0x150] sm:$0xff]
    %v69 = vld [vmem:[#allocation2 + $0x158] sm:$0xff]
    %v70 = vld [vmem:[#allocation2 + $0x160] sm:$0xff]
    %v71 = vld [vmem:[#allocation2 + $0x168] sm:$0xff]
    %v72 = vld [vmem:[#allocation2 + $0x170] sm:$0xff]
    %v73 = vld [vmem:[#allocation2 + $0x178] sm:$0xff]
    %v74 = vadd.f32 %v26, %v34
    %v75 = vadd.f32 %v74, %v42
    %v76 = vadd.f32 %v27, %v35
    %v77 = vadd.f32 %v76, %v43
    %v78 = vadd.f32 %v28, %v36
    %v79 = vadd.f32 %v78, %v44
    %v80 = vadd.f32 %v29, %v37
    %v81 = vadd.f32 %v80, %v45
    %v82 = vadd.f32 %v30, %v38
    %v83 = vadd.f32 %v82, %v46
    %v84 = vadd.f32 %v31, %v39
    %v85 = vadd.f32 %v84, %v47
    %v86 = vadd.f32 %v32, %v40
    %v87 = vadd.f32 %v86, %v48
    %v88 = vadd.f32 %v33, %v41
    %v89 = vadd.f32 %v88, %v49
    %v90 = vadd.f32 %v50, %v58
    %v91 = vadd.f32 %v90, %v66
    %v92 = vadd.f32 %v51, %v59
    %v93 = vadd.f32 %v92, %v67
    %v94 = vadd.f32 %v52, %v60
    %v95 = vadd.f32 %v94, %v68
    %v96 = vadd.f32 %v53, %v61
    %v97 = vadd.f32 %v96, %v69
    %v98 = vadd.f32 %v54, %v62
    %v99 = vadd.f32 %v98, %v70
    %v100 = vadd.f32 %v55, %v63
    %v101 = vadd.f32 %v100, %v71
    %v102 = vadd.f32 %v56, %v64
    %v103 = vadd.f32 %v102, %v72
    %v104 = vadd.f32 %v57, %v65
    %v105 = vadd.f32 %v104, %v73
    %v106 = vlaneseq
    %v107 = vshrl.u32 %v106, 7
    %v108 = vld [vmem:[%s0] sm:$0x3]
    %v110 = vunpack.c.l.s4 1966171168
    %v111 = vunpack.c.0.s8 %v110
    %v112 = vlaneseq
    %v113 = vshrl.u32 %v112, 7
    %v114 = vsub.s32 %v111, %v113
    %v115 = vrot.slane %v108, %v114
    %v116 = vcombine.high %v115, %v115
    %v118 = vunpack.c.l.s4 1966171168
    %v119 = vunpack.c.0.s8 %v118
    %v120 = vlaneseq
    %v121 = vshrl.u32 %v120, 7
    %v122 = vsub.s32 %v119, %v121
    %v123 = vrot.slane %v115, %v122
    %v125 = vunpack.c.l.s4 1966171168
    %v126 = vunpack.c.0.s8 %v125
    %v127 = vlaneseq
    %v128 = vshrl.u32 %v127, 7
    %v129 = vsub.s32 %v126, %v128
    %v130 = vrot.slane %v116, %v129
    %v131 = vlaneseq
    %v132 = vshrl.u32 %v131, 7
    %v133 = vsub.s32 0, %v132
    %v134 = vrot.slane %v123, %v133
    %v135 = vlaneseq
    %v136 = vshrl.u32 %v135, 7
    %v137 = vsub.s32 0, %v136
    %v138 = vrot.slane %v130, %v137
    %vm139 = vcmp.lt.s32.totalorder %v107, %v134
    %vm140 = vcmp.lt.s32.totalorder %v107, %v138
    %v141 = vsel %vm139, 1, 0
    %v142 = vsel %vm140, 1, 0
    %143 = vset.pattern.permute.xlu0 0
    %144 = vperm.xlu0 %143, %v141
    %v145 = vpop.permute.xlu0 %144
    %146 = vset.pattern.permute.xlu0 0
    %147 = vperm.xlu0 %146, %v142
    %v148 = vpop.permute.xlu0 %147
    %vm149 = vcmp.eq.s32.totalorder %v145, 1
    %vm150 = vcmp.eq.s32.totalorder %v148, 1
    %v151 = vsel %vm149, %v75, 0.0
    %v152 = vsel %vm149, %v77, 0.0
    %v153 = vsel %vm149, %v79, 0.0
    %v154 = vsel %vm149, %v81, 0.0
    %v155 = vsel %vm149, %v83, 0.0
    %v156 = vsel %vm149, %v85, 0.0
    %v157 = vsel %vm149, %v87, 0.0
    %v158 = vsel %vm149, %v89, 0.0
    %v159 = vsel %vm150, %v91, 0.0
    %v160 = vsel %vm150, %v93, 0.0
    %v161 = vsel %vm150, %v95, 0.0
    %v162 = vsel %vm150, %v97, 0.0
    %v163 = vsel %vm150, %v99, 0.0
    %v164 = vsel %vm150, %v101, 0.0
    %v165 = vsel %vm150, %v103, 0.0
    %v166 = vsel %vm150, %v105, 0.0
    %167 = vst [vmem:[#allocation5] sm:$0xff] %v151
    %168 = vst [vmem:[#allocation5 + $0x8] sm:$0xff] %v152
    %169 = vst [vmem:[#allocation5 + $0x10] sm:$0xff] %v153
    %170 = vst [vmem:[#allocation5 + $0x18] sm:$0xff] %v154
    %171 = vst [vmem:[#allocation5 + $0x20] sm:$0xff] %v155
    %172 = vst [vmem:[#allocation5 + $0x28] sm:$0xff] %v156
    %173 = vst [vmem:[#allocation5 + $0x30] sm:$0xff] %v157
    %174 = vst [vmem:[#allocation5 + $0x38] sm:$0xff] %v158
    %175 = vst [vmem:[#allocation5 + $0x40] sm:$0xff] %v159
    %176 = vst [vmem:[#allocation5 + $0x48] sm:$0xff] %v160
    %177 = vst [vmem:[#allocation5 + $0x50] sm:$0xff] %v161
    %178 = vst [vmem:[#allocation5 + $0x58] sm:$0xff] %v162
    %179 = vst [vmem:[#allocation5 + $0x60] sm:$0xff] %v163
    %180 = vst [vmem:[#allocation5 + $0x68] sm:$0xff] %v164
    %181 = vst [vmem:[#allocation5 + $0x70] sm:$0xff] %v165
    %182 = vst [vmem:[#allocation5 + $0x78] sm:$0xff] %v166
    // Predicated region
    $region14: #{tpu_custom_call.1} parent=1 // pred_check
      _
    $region15: #{tpu_custom_call.1} parent=1 // pred_check_branch
      %184 = sbr.rel (0) target = $region17
    $region16: #{tpu_custom_call.1} parent=1 // pred_region
      %s186 = ssub.s32 2048, 2048
      %187 = vsyncadd [#allocation4], %s186
      %s188 = sshll.u32 [#allocation5], 4
      %s189 = int_to_ptr.vmem [resolvable:$true] %s188
      %194 = dma.vmem_to_hbm [thread:$0]  %s189, 2048, %s2, [#allocation4], 1024, 1024, 64
    $region17: #{tpu_custom_call.1} parent=1 // pred_fallthru
      _
    // Predicated region
    $region18: #{tpu_custom_call.1} parent=1 // pred_check
      _
    $region19: #{tpu_custom_call.1} parent=1 // pred_check_branch
      %196 = sbr.rel (0) target = $region21
    $region20: #{tpu_custom_call.1} parent=1 // pred_region
      %197 = dma.done [#allocation4], 2048
    $region21: #{tpu_custom_call.1} parent=1 // pred_fallthru
      _
    %198 = vsyncpa [#allocation3], 1
    %199 = vsyncpa [#allocation4], 1

</llo_original>
